<compile_context>
chip_gen: v6e
topology: v6e:2x2x1
jax: 0.10.0
libtpu: 0.0.40
codegen_flags: <defaults>
</compile_context>

<pallas_src>
import functools

import jax
import jax.numpy as jnp
from jax.experimental import pallas as pl
from jax.experimental.pallas import tpu as pltpu


def _round_up(n, m):
    return ((n + m - 1) // m) * m


def _pick_tm(batch):
    # bf16 sublane packing -> tiles multiple of 16; keep >= 2 grid steps when the batch
    # allows it (both v7x TensorCores get work); cap at 256 (MXU-friendly, tiny VMEM).
    if batch <= 16:
        return 16
    return min(256, _round_up(-(-batch // 2), 16))


def class_block_kernel(x_ref, w1_ref, b1_ref, w2_ref, b2_ref, logits_ref, feat_ref):
    # x arrives in f32; cast to bf16 on the VPU (hidden under the MXU), accumulate in f32.
    x_bf = x_ref[...].astype(jnp.bfloat16)
    # BN (inference) is already folded into (w1, b1).
    h = jnp.dot(x_bf, w1_ref[...], preferred_element_type=jnp.float32) + b1_ref[...]
    # LeakyReLU(negative_slope=0.1) in f32 (f32 VPU path works on all generations).
    h = jnp.where(h > 0, h, 0.1 * h)
    # TODO(synk): training-mode Dropout(p=0.5) (pltpu.prng_* mask) not emitted; eval mode is identity.
    h_bf = h.astype(jnp.bfloat16)
    feat_ref[...] = h_bf                       # bf16 writeback (largest output stream)
    # Classifier matmul: bf16 LHS/RHS, f32 accumulation + f32 bias epilogue.
    logits = jnp.dot(h_bf, w2_ref[...], preferred_element_type=jnp.float32) + b2_ref[...]
    logits_ref[...] = logits.astype(logits_ref.dtype)


def prepare_params(w1, b1, gamma, beta, running_mean, running_var, w2, b2, eps=1e-5):
    """One-time (outside the jitted forward): fold inference BN into the bottleneck Linear,
    pad every feature dim to a 128 multiple (lane-dense), and cast weights to bf16."""
    D, H = w1.shape
    C = w2.shape[1]
    scale = gamma * jax.lax.rsqrt(running_var + eps)          # (1, H)
    w1f = w1 * scale                                          # (D, H)
    b1f = (b1 - running_mean) * scale + beta                  # (1, H)

    D_p = _round_up(D, 128)
    H_p = _round_up(H, 128)
    C_p = _round_up(C, 128)

    w1_p = jnp.pad(w1f, ((0, D_p - D), (0, H_p - H))).astype(jnp.bfloat16)
    b1_p = jnp.pad(b1f, ((0, 0), (0, H_p - H))).astype(jnp.float32)
    w2_p = jnp.pad(w2, ((0, H_p - H), (0, C_p - C))).astype(jnp.bfloat16)
    b2_p = jnp.pad(b2, ((0, 0), (0, C_p - C))).astype(jnp.float32)
    return w1_p, b1_p, w2_p, b2_p, H, C


@functools.partial(jax.jit, static_argnames=("h_dim", "c_dim", "single_buffer_weights"))
def _forward_impl(x, w1_p, b1_p, w2_p, b2_p, *, h_dim, c_dim, single_buffer_weights):
    B, D = x.shape
    D_p, H_p = w1_p.shape
    C_p = w2_p.shape[1]

    TM = _pick_tm(B)
    B_p = _round_up(B, TM)

    # Pad x only when needed; for the typical ReID case (D=2048, B a multiple of the
    # tile) this is a no-op and x streams straight from HBM in f32.
    if (B_p, D_p) != (B, D):
        x = jnp.pad(x, ((0, B_p - B), (0, D_p - D)))

    grid = (B_p // TM,)

    def resident(shape):
        # Constant index_map -> block never changes; single-buffer it when supported.
        if single_buffer_weights:
            return pl.BlockSpec(shape, lambda i: (0, 0), pipeline_mode=pl.Buffered(1))
        return pl.BlockSpec(shape, lambda i: (0, 0))

    # Honest VMEM estimate: double-buffered streams (x f32 in, logits f32 / feat bf16 out),
    # weights single- or double-buffered depending on the mode actually used.
    wbuf = 1 if single_buffer_weights else 2
    est = (2 * TM * D_p * 4
           + wbuf * ((D_p * H_p + H_p * C_p) * 2 + (H_p + C_p) * 4)
           + 2 * TM * H_p * 2
           + 2 * TM * C_p * 4)
    # Clamp below v7x's physical 64 MiB per-TC VMEM (leave headroom for compiler scratch).
    vmem_limit = min(56 * 1024 * 1024, max(32 * 1024 * 1024, int(est * 1.25)))

    logits_p, feat_p = pl.pallas_call(
        class_block_kernel,
        grid=grid,
        in_specs=[
            pl.BlockSpec((TM, D_p), lambda i: (i, 0)),    # x tile (pipelined, f32)
            resident((D_p, H_p)),                         # w1 (resident, bf16)
            resident((1, H_p)),                           # b1 (resident, f32)
            resident((H_p, C_p)),                         # w2 (resident, bf16)
            resident((1, C_p)),                           # b2 (resident, f32)
        ],
        out_specs=(
            pl.BlockSpec((TM, C_p), lambda i: (i, 0)),    # logits tile (f32)
            pl.BlockSpec((TM, H_p), lambda i: (i, 0)),    # bottleneck-feature tile (bf16)
        ),
        out_shape=(
            jax.ShapeDtypeStruct((B_p, C_p), jnp.float32),
            jax.ShapeDtypeStruct((B_p, H_p), jnp.bfloat16),
        ),
        compiler_params=pltpu.CompilerParams(
            dimension_semantics=("parallel",),
            vmem_limit_bytes=vmem_limit,
        ),
    )(x, w1_p, b1_p, w2_p, b2_p)

    # Strip batch / lane padding.
    return [logits_p[:B, :c_dim], feat_p[:B, :h_dim]]


# Capability flag: None = untested, True/False once probed.
_WEIGHTS_SINGLE_BUFFERED = None if hasattr(pl, "Buffered") else False


def class_block_forward(x, prepared):
    """ClassBlock forward. Uses single-buffered resident weights when supported,
    otherwise falls back to default double-buffered BlockSpecs."""
    global _WEIGHTS_SINGLE_BUFFERED
    w1_p, b1_p, w2_p, b2_p, h_dim, c_dim = prepared
    if _WEIGHTS_SINGLE_BUFFERED is None:
        try:
            out = _forward_impl(x, w1_p, b1_p, w2_p, b2_p,
                                h_dim=h_dim, c_dim=c_dim, single_buffer_weights=True)
            jax.block_until_ready(out)
            _WEIGHTS_SINGLE_BUFFERED = True
            return out
        except Exception:
            _WEIGHTS_SINGLE_BUFFERED = False
    return _forward_impl(x, w1_p, b1_p, w2_p, b2_p,
                         h_dim=h_dim, c_dim=c_dim,
                         single_buffer_weights=_WEIGHTS_SINGLE_BUFFERED)


def init_params(key, input_dim, num_bottleneck, class_num):
    k1, k2, k3 = jax.random.split(key, 3)
    # weights_init_kaiming: Linear -> kaiming_normal(mode='fan_out'), bias 0
    std1 = (2.0 / num_bottleneck) ** 0.5
    w1 = std1 * jax.random.normal(k1, (input_dim, num_bottleneck), jnp.float32)
    b1 = jnp.zeros((1, num_bottleneck), jnp.float32)
    # BatchNorm1d: gamma ~ N(1.0, 0.02), beta = 0; running stats at init: mean=0, var=1
    gamma = 1.0 + 0.02 * jax.random.normal(k2, (1, num_bottleneck), jnp.float32)
    beta = jnp.zeros((1, num_bottleneck), jnp.float32)
    running_mean = jnp.zeros((1, num_bottleneck), jnp.float32)
    running_var = jnp.ones((1, num_bottleneck), jnp.float32)
    # weights_init_classifier: Linear -> N(0, 0.001), bias 0
    w2 = 0.001 * jax.random.normal(k3, (num_bottleneck, class_num), jnp.float32)
    b2 = jnp.zeros((1, class_num), jnp.float32)
    return w1, b1, gamma, beta, running_mean, running_var, w2, b2


if __name__ == "__main__":
    key = jax.random.PRNGKey(0)
    kx, kp = jax.random.split(key)

    B, input_dim, num_bottleneck, class_num = 8, 32, 64, 16
    x = jax.random.normal(kx, (B, input_dim), jnp.float32)
    raw_params = init_params(kp, input_dim, num_bottleneck, class_num)
    prepared = prepare_params(*raw_params)        # one-time BN fold + pad + bf16 cast

    logits, feat = class_block_forward(x, prepared)
    jax.block_until_ready((logits, feat))

    # Pure-JAX f32 reference (un-folded BN); tolerances accommodate the bf16 MXU path.
    w1, b1, gamma, beta, rm, rv, w2, b2 = raw_params
    h_ref = x @ w1 + b1
    h_ref = (h_ref - rm) * jax.lax.rsqrt(rv + 1e-5) * gamma + beta
    h_ref = jnp.where(h_ref > 0, h_ref, 0.1 * h_ref)
    logits_ref = h_ref @ w2 + b2

    assert logits.shape == (B, class_num) and feat.shape == (B, num_bottleneck)
    assert jnp.allclose(feat.astype(jnp.float32), h_ref, atol=3e-2, rtol=3e-2), "feature mismatch"
    assert jnp.allclose(logits, logits_ref, atol=3e-3, rtol=3e-2), "logits mismatch"

    print("KERNEL_OK")
</pallas_src>

<mosaic_0001>
module attributes {stable_mosaic.version = 11 : i64} {
  func.func @class_block_kernel(%arg0: i32, %arg1: memref<16x128xf32, #tpu.memory_space<vmem>>, %arg2: memref<128x128xbf16, #tpu.memory_space<vmem>>, %arg3: memref<1x128xf32, #tpu.memory_space<vmem>>, %arg4: memref<128x128xbf16, #tpu.memory_space<vmem>>, %arg5: memref<1x128xf32, #tpu.memory_space<vmem>>, %arg6: memref<16x128xf32, #tpu.memory_space<vmem>>, %arg7: memref<16x128xbf16, #tpu.memory_space<vmem>>) attributes {dimension_semantics = [#tpu.dimension_semantics<parallel>], iteration_bounds = array<i64: 1>, scalar_prefetch = 0 : i64, scratch_operands = 0 : i64, tpu.core_type = #tpu.core_type<tc>, window_params = [{transform_indices = @transform_0, window_bounds = array<i64: 16, 128>}, {pipeline_mode = #tpu.pipeline_mode<synchronous>, transform_indices = @transform_1, window_bounds = array<i64: 128, 128>}, {pipeline_mode = #tpu.pipeline_mode<synchronous>, transform_indices = @transform_2, window_bounds = array<i64: 1, 128>}, {pipeline_mode = #tpu.pipeline_mode<synchronous>, transform_indices = @transform_3, window_bounds = array<i64: 128, 128>}, {pipeline_mode = #tpu.pipeline_mode<synchronous>, transform_indices = @transform_4, window_bounds = array<i64: 1, 128>}, {transform_indices = @transform_5, window_bounds = array<i64: 16, 128>}, {transform_indices = @transform_6, window_bounds = array<i64: 16, 128>}]} {
    %c0 = arith.constant 0 : index
    %c0_0 = arith.constant 0 : index
    %0 = vector.load %arg1[%c0, %c0_0] : memref<16x128xf32, #tpu.memory_space<vmem>>, vector<16x128xf32>
    %1 = arith.truncf %0 : vector<16x128xf32> to vector<16x128xbf16>
    %c0_1 = arith.constant 0 : index
    %c0_2 = arith.constant 0 : index
    %2 = vector.load %arg2[%c0_1, %c0_2] : memref<128x128xbf16, #tpu.memory_space<vmem>>, vector<128x128xbf16>
    %cst = arith.constant dense<0.000000e+00> : vector<16x128xf32>
    %3 = tpu.matmul %1, %2, %cst {dimension_numbers = #tpu.dot_dimension_numbers<[1], [0], [0], [1], [0, 0, 1, 1], [], []>} : vector<16x128xbf16>, vector<128x128xbf16>, vector<16x128xf32> -> vector<16x128xf32>
    %c0_3 = arith.constant 0 : index
    %c0_4 = arith.constant 0 : index
    %4 = vector.load %arg3[%c0_3, %c0_4] : memref<1x128xf32, #tpu.memory_space<vmem>>, vector<1x128xf32>
    %5 = vector.broadcast %4 : vector<1x128xf32> to vector<16x128xf32>
    %6 = arith.addf %3, %5 : vector<16x128xf32>
    %cst_5 = arith.constant 0.000000e+00 : f32
    %7 = vector.broadcast %cst_5 : f32 to vector<16x128xf32>
    %8 = arith.cmpf ogt, %6, %7 : vector<16x128xf32>
    %cst_6 = arith.constant 1.000000e-01 : f32
    %9 = vector.broadcast %cst_6 : f32 to vector<16x128xf32>
    %10 = arith.mulf %9, %6 : vector<16x128xf32>
    %11 = arith.select %8, %6, %10 : vector<16x128xi1>, vector<16x128xf32>
    %12 = arith.truncf %11 : vector<16x128xf32> to vector<16x128xbf16>
    %c0_7 = arith.constant 0 : index
    %c0_8 = arith.constant 0 : index
    %13 = vector.load %arg7[%c0_7, %c0_8] : memref<16x128xbf16, #tpu.memory_space<vmem>>, vector<16x128xbf16>
    tpu.vector_store %arg7[%c0_7, %c0_8], %12 {strides = array<i32>} : memref<16x128xbf16, #tpu.memory_space<vmem>>, vector<16x128xbf16>,
    %c0_9 = arith.constant 0 : index
    %c0_10 = arith.constant 0 : index
    %14 = vector.load %arg4[%c0_9, %c0_10] : memref<128x128xbf16, #tpu.memory_space<vmem>>, vector<128x128xbf16>
    %cst_11 = arith.constant dense<0.000000e+00> : vector<16x128xf32>
    %15 = tpu.matmul %12, %14, %cst_11 {dimension_numbers = #tpu.dot_dimension_numbers<[1], [0], [0], [1], [0, 0, 1, 1], [], []>} : vector<16x128xbf16>, vector<128x128xbf16>, vector<16x128xf32> -> vector<16x128xf32>
    %c0_12 = arith.constant 0 : index
    %c0_13 = arith.constant 0 : index
    %16 = vector.load %arg5[%c0_12, %c0_13] : memref<1x128xf32, #tpu.memory_space<vmem>>, vector<1x128xf32>
    %17 = vector.broadcast %16 : vector<1x128xf32> to vector<16x128xf32>
    %18 = arith.addf %15, %17 : vector<16x128xf32>
    %c0_14 = arith.constant 0 : index
    %c0_15 = arith.constant 0 : index
    %19 = vector.load %arg6[%c0_14, %c0_15] : memref<16x128xf32, #tpu.memory_space<vmem>>, vector<16x128xf32>
    tpu.vector_store %arg6[%c0_14, %c0_15], %18 {strides = array<i32>} : memref<16x128xf32, #tpu.memory_space<vmem>>, vector<16x128xf32>,
    return
  }
  func.func @transform_0(%arg0: i32) -> (i32, i32) {
    %c0_i32 = arith.constant 0 : i32
    %c0_i32_0 = arith.constant 0 : i32
    return %arg0, %c0_i32 : i32, i32
  }
  func.func @transform_1(%arg0: i32) -> (i32, i32) {
    %c0_i32 = arith.constant 0 : i32
    %c0_i32_0 = arith.constant 0 : i32
    %c0_i32_1 = arith.constant 0 : i32
    return %c0_i32, %c0_i32_0 : i32, i32
  }
  func.func @transform_2(%arg0: i32) -> (i32, i32) {
    %c0_i32 = arith.constant 0 : i32
    %c0_i32_0 = arith.constant 0 : i32
    %c0_i32_1 = arith.constant 0 : i32
    return %c0_i32, %c0_i32_0 : i32, i32
  }
  func.func @transform_3(%arg0: i32) -> (i32, i32) {
    %c0_i32 = arith.constant 0 : i32
    %c0_i32_0 = arith.constant 0 : i32
    %c0_i32_1 = arith.constant 0 : i32
    return %c0_i32, %c0_i32_0 : i32, i32
  }
  func.func @transform_4(%arg0: i32) -> (i32, i32) {
    %c0_i32 = arith.constant 0 : i32
    %c0_i32_0 = arith.constant 0 : i32
    %c0_i32_1 = arith.constant 0 : i32
    return %c0_i32, %c0_i32_0 : i32, i32
  }
  func.func @transform_5(%arg0: i32) -> (i32, i32) {
    %c0_i32 = arith.constant 0 : i32
    %c0_i32_0 = arith.constant 0 : i32
    return %arg0, %c0_i32 : i32, i32
  }
  func.func @transform_6(%arg0: i32) -> (i32, i32) {
    %c0_i32 = arith.constant 0 : i32
    %c0_i32_0 = arith.constant 0 : i32
    return %arg0, %c0_i32 : i32, i32
  }
}

module attributes {stable_mosaic.version = 11 : i64} {
  func.func @class_block_kernel(%arg0: i32, %arg1: memref<16x128xf32, #tpu.memory_space<vmem>>, %arg2: memref<128x128xbf16, #tpu.memory_space<vmem>>, %arg3: memref<1x128xf32, #tpu.memory_space<vmem>>, %arg4: memref<128x128xbf16, #tpu.memory_space<vmem>>, %arg5: memref<1x128xf32, #tpu.memory_space<vmem>>, %arg6: memref<16x128xf32, #tpu.memory_space<vmem>>, %arg7: memref<16x128xbf16, #tpu.memory_space<vmem>>) attributes {dimension_semantics = [#tpu.dimension_semantics<parallel>], iteration_bounds = array<i64: 1>, scalar_prefetch = 0 : i64, scratch_operands = 0 : i64, tpu.core_type = #tpu.core_type<tc>, window_params = [{transform_indices = @transform_0, window_bounds = array<i64: 16, 128>}, {pipeline_mode = #tpu.pipeline_mode<synchronous>, transform_indices = @transform_1, window_bounds = array<i64: 128, 128>}, {pipeline_mode = #tpu.pipeline_mode<synchronous>, transform_indices = @transform_2, window_bounds = array<i64: 1, 128>}, {pipeline_mode = #tpu.pipeline_mode<synchronous>, transform_indices = @transform_3, window_bounds = array<i64: 128, 128>}, {pipeline_mode = #tpu.pipeline_mode<synchronous>, transform_indices = @transform_4, window_bounds = array<i64: 1, 128>}, {transform_indices = @transform_5, window_bounds = array<i64: 16, 128>}, {transform_indices = @transform_6, window_bounds = array<i64: 16, 128>}]} {
    %c0 = arith.constant 0 : index
    %c0_0 = arith.constant 0 : index
    %0 = vector.load %arg1[%c0, %c0_0] : memref<16x128xf32, #tpu.memory_space<vmem>>, vector<16x128xf32>
    %1 = arith.truncf %0 : vector<16x128xf32> to vector<16x128xbf16>
    %c0_1 = arith.constant 0 : index
    %c0_2 = arith.constant 0 : index
    %2 = vector.load %arg2[%c0_1, %c0_2] : memref<128x128xbf16, #tpu.memory_space<vmem>>, vector<128x128xbf16>
    %cst = arith.constant dense<0.000000e+00> : vector<16x128xf32>
    %3 = tpu.matmul %1, %2, %cst {dimension_numbers = #tpu.dot_dimension_numbers<[1], [0], [0], [1], [0, 0, 1, 1], [], []>} : vector<16x128xbf16>, vector<128x128xbf16>, vector<16x128xf32> -> vector<16x128xf32>
    %c0_3 = arith.constant 0 : index
    %c0_4 = arith.constant 0 : index
    %4 = vector.load %arg3[%c0_3, %c0_4] : memref<1x128xf32, #tpu.memory_space<vmem>>, vector<1x128xf32>
    %5 = vector.broadcast %4 : vector<1x128xf32> to vector<16x128xf32>
    %6 = arith.addf %3, %5 : vector<16x128xf32>
    %cst_5 = arith.constant 0.000000e+00 : f32
    %7 = vector.broadcast %cst_5 : f32 to vector<16x128xf32>
    %8 = arith.cmpf ogt, %6, %7 : vector<16x128xf32>
    %cst_6 = arith.constant 1.000000e-01 : f32
    %9 = vector.broadcast %cst_6 : f32 to vector<16x128xf32>
    %10 = arith.mulf %9, %6 : vector<16x128xf32>
    %11 = arith.select %8, %6, %10 : vector<16x128xi1>, vector<16x128xf32>
    %12 = arith.truncf %11 : vector<16x128xf32> to vector<16x128xbf16>
    %c0_7 = arith.constant 0 : index
    %c0_8 = arith.constant 0 : index
    %13 = vector.load %arg7[%c0_7, %c0_8] : memref<16x128xbf16, #tpu.memory_space<vmem>>, vector<16x128xbf16>
    tpu.vector_store %arg7[%c0_7, %c0_8], %12 {strides = array<i32>} : memref<16x128xbf16, #tpu.memory_space<vmem>>, vector<16x128xbf16>,
    %c0_9 = arith.constant 0 : index
    %c0_10 = arith.constant 0 : index
    %14 = vector.load %arg4[%c0_9, %c0_10] : memref<128x128xbf16, #tpu.memory_space<vmem>>, vector<128x128xbf16>
    %cst_11 = arith.constant dense<0.000000e+00> : vector<16x128xf32>
    %15 = tpu.matmul %12, %14, %cst_11 {dimension_numbers = #tpu.dot_dimension_numbers<[1], [0], [0], [1], [0, 0, 1, 1], [], []>} : vector<16x128xbf16>, vector<128x128xbf16>, vector<16x128xf32> -> vector<16x128xf32>
    %c0_12 = arith.constant 0 : index
    %c0_13 = arith.constant 0 : index
    %16 = vector.load %arg5[%c0_12, %c0_13] : memref<1x128xf32, #tpu.memory_space<vmem>>, vector<1x128xf32>
    %17 = vector.broadcast %16 : vector<1x128xf32> to vector<16x128xf32>
    %18 = arith.addf %15, %17 : vector<16x128xf32>
    %c0_14 = arith.constant 0 : index
    %c0_15 = arith.constant 0 : index
    %19 = vector.load %arg6[%c0_14, %c0_15] : memref<16x128xf32, #tpu.memory_space<vmem>>, vector<16x128xf32>
    tpu.vector_store %arg6[%c0_14, %c0_15], %18 {strides = array<i32>} : memref<16x128xf32, #tpu.memory_space<vmem>>, vector<16x128xf32>,
    return
  }
  func.func @transform_0(%arg0: i32) -> (i32, i32) {
    %c0_i32 = arith.constant 0 : i32
    %c0_i32_0 = arith.constant 0 : i32
    return %arg0, %c0_i32 : i32, i32
  }
  func.func @transform_1(%arg0: i32) -> (i32, i32) {
    %c0_i32 = arith.constant 0 : i32
    %c0_i32_0 = arith.constant 0 : i32
    %c0_i32_1 = arith.constant 0 : i32
    return %c0_i32, %c0_i32_0 : i32, i32
  }
  func.func @transform_2(%arg0: i32) -> (i32, i32) {
    %c0_i32 = arith.constant 0 : i32
    %c0_i32_0 = arith.constant 0 : i32
    %c0_i32_1 = arith.constant 0 : i32
    return %c0_i32, %c0_i32_0 : i32, i32
  }
  func.func @transform_3(%arg0: i32) -> (i32, i32) {
    %c0_i32 = arith.constant 0 : i32
    %c0_i32_0 = arith.constant 0 : i32
    %c0_i32_1 = arith.constant 0 : i32
    return %c0_i32, %c0_i32_0 : i32, i32
  }
  func.func @transform_4(%arg0: i32) -> (i32, i32) {
    %c0_i32 = arith.constant 0 : i32
    %c0_i32_0 = arith.constant 0 : i32
    %c0_i32_1 = arith.constant 0 : i32
    return %c0_i32, %c0_i32_0 : i32, i32
  }
  func.func @transform_5(%arg0: i32) -> (i32, i32) {
    %c0_i32 = arith.constant 0 : i32
    %c0_i32_0 = arith.constant 0 : i32
    return %arg0, %c0_i32 : i32, i32
  }
  func.func @transform_6(%arg0: i32) -> (i32, i32) {
    %c0_i32 = arith.constant 0 : i32
    %c0_i32_0 = arith.constant 0 : i32
    return %arg0, %c0_i32 : i32, i32
  }
}

</mosaic_0001>

<llo_original>
// kernel: _forward_impl.1
$region0: #{_forward_impl.1}
  #allocation0 [shape = 'u32[]', space=smem, size = 0x4, offset = 0x4, fixed_abs, tag = 'smem constant byte address 0x4 - core index']
  #allocation1 [shape = 'u32[144,128]{1,0:T(1,128)}', space=vmem, size = 0x12000, scoped, tag = 'internal scratch']
  %s0 = inlined_call_operand.vmem [shape: f32[16,128], index: 0, kind: input, shape index: {}]
  %s1 = inlined_call_operand.hbm [shape: bf16[128,128], index: 1, kind: input, shape index: {}]
  %s2 = inlined_call_operand.vmem [shape: f32[1,128], index: 2, kind: input, shape index: {}]
  %s3 = inlined_call_operand.hbm [shape: bf16[128,128], index: 3, kind: input, shape index: {}]
  %s4 = inlined_call_operand.vmem [shape: f32[1,128], index: 4, kind: input, shape index: {}]
  %s5 = inlined_call_operand.vmem [shape: f32[16,128], index: 5, kind: output, shape index: {0}]
  %s6 = inlined_call_operand.vmem [shape: bf16[16,128], index: 6, kind: output, shape index: {1}]
  %7 = xla_tuple %s5, %s6
  %s8 = sld [smem:[#allocation0]]
  $region46: #{_forward_impl.1} parent=0
    _
  %s10 = ssub.s32 1, %s8
  %s11 = scalar_select 0, %s10, %s8
  $region1: #{_forward_impl.1} parent=0
    #allocation2 [shape = 'u8[32768]{0}', space=vmem, size = 0x8000, scoped, tag = 'input window, operand 1, single buffered']
    #allocation3 [shape = 's32[1]{0}', space=sflag, size = 0x4, scoped, tag = 'scoped memory for _forward_impl.1']
    #allocation4 [shape = 'u8[32768]{0}', space=vmem, size = 0x8000, scoped, tag = 'input window, operand 3, single buffered']
    #allocation5 [shape = 's32[1]{0}', space=sflag, size = 0x4, scoped, tag = 'scoped memory for _forward_impl.1']
    %12 = vsyncpa [#allocation3], 0
    %13 = vsyncpa [#allocation5], 0
    // Predicated region
    $region2: #{_forward_impl.1} parent=1 // pred_check
      _
    $region3: #{_forward_impl.1} parent=1 // pred_check_branch
      %15 = sbr.rel (0) target = $region5
    $region4: #{_forward_impl.1} parent=1 // pred_region
      _
    $region5: #{_forward_impl.1} parent=1 // pred_fallthru
      _
    // Predicated region
    $region6: #{_forward_impl.1} parent=1 // pred_check
      _
    $region7: #{_forward_impl.1} parent=1 // pred_check_branch
      %17 = sbr.rel (0) target = $region9
    $region8: #{_forward_impl.1} parent=1 // pred_region
      %s19 = ssub.s32 1024, 1024
      %20 = vsyncadd [#allocation3], %s19
      %s21 = sshll.u32 [#allocation2], 4
      %s22 = int_to_ptr.vmem [resolvable:$true] %s21
      %27 = dma.hbm_to_vmem [thread:$0]  %s1, 1024, %s22, [#allocation3], 64, 64, 4
    $region9: #{_forward_impl.1} parent=1 // pred_fallthru
      _
    // Predicated region
    $region10: #{_forward_impl.1} parent=1 // pred_check
      _
    $region11: #{_forward_impl.1} parent=1 // pred_check_branch
      %29 = sbr.rel (0) target = $region13
    $region12: #{_forward_impl.1} parent=1 // pred_region
      _
    $region13: #{_forward_impl.1} parent=1 // pred_fallthru
      _
    // Predicated region
    $region14: #{_forward_impl.1} parent=1 // pred_check
      _
    $region15: #{_forward_impl.1} parent=1 // pred_check_branch
      %31 = sbr.rel (0) target = $region17
    $region16: #{_forward_impl.1} parent=1 // pred_region
      %s33 = ssub.s32 1024, 1024
      %34 = vsyncadd [#allocation5], %s33
      %s35 = sshll.u32 [#allocation4], 4
      %s36 = int_to_ptr.vmem [resolvable:$true] %s35
      %41 = dma.hbm_to_vmem [thread:$0]  %s3, 1024, %s36, [#allocation5], 64, 64, 4
    $region17: #{_forward_impl.1} parent=1 // pred_fallthru
      _
    // Predicated region
    $region18: #{_forward_impl.1} parent=1 // pred_check
      _
    $region19: #{_forward_impl.1} parent=1 // pred_check_branch
      %43 = sbr.rel (0) target = $region21
    $region20: #{_forward_impl.1} parent=1 // pred_region
      _
    $region21: #{_forward_impl.1} parent=1 // pred_fallthru
      _
    // Predicated region
    $region22: #{_forward_impl.1} parent=1 // pred_check
      _
    $region23: #{_forward_impl.1} parent=1 // pred_check_branch
      %45 = sbr.rel (0) target = $region25
    $region24: #{_forward_impl.1} parent=1 // pred_region
      %46 = dma.done [#allocation3], 1024
    $region25: #{_forward_impl.1} parent=1 // pred_fallthru
      _
    // Predicated region
    $region26: #{_forward_impl.1} parent=1 // pred_check
      _
    $region27: #{_forward_impl.1} parent=1 // pred_check_branch
      %48 = sbr.rel (0) target = $region29
    $region28: #{_forward_impl.1} parent=1 // pred_region
      %49 = dma.done [#allocation5], 1024
    $region29: #{_forward_impl.1} parent=1 // pred_fallthru
      _
    %v51 = vld [vmem:[%s0] sm:$0xff]
    %v52 = vld [vmem:[%s0 + $0x8] sm:$0xff]
    %v53 = vpack.c.bf16 %v52, %v51
    %v54 = vld [vmem:[#allocation2] sm:$0xf]
    %v55 = vld [vmem:[#allocation2 + $0x4] sm:$0xf]
    %v56 = vld [vmem:[#allocation2 + $0x8] sm:$0xf]
    %v57 = vld [vmem:[#allocation2 + $0xc] sm:$0xf]
    %v58 = vld [vmem:[#allocation2 + $0x10] sm:$0xf]
    %v59 = vld [vmem:[#allocation2 + $0x14] sm:$0xf]
    %v60 = vld [vmem:[#allocation2 + $0x18] sm:$0xf]
    %v61 = vld [vmem:[#allocation2 + $0x1c] sm:$0xf]
    %v62 = vld [vmem:[#allocation2 + $0x20] sm:$0xf]
    %v63 = vld [vmem:[#allocation2 + $0x24] sm:$0xf]
    %v64 = vld [vmem:[#allocation2 + $0x28] sm:$0xf]
    %v65 = vld [vmem:[#allocation2 + $0x2c] sm:$0xf]
    %v66 = vld [vmem:[#allocation2 + $0x30] sm:$0xf]
    %v67 = vld [vmem:[#allocation2 + $0x34] sm:$0xf]
    %v68 = vld [vmem:[#allocation2 + $0x38] sm:$0xf]
    %v69 = vld [vmem:[#allocation2 + $0x3c] sm:$0xf]
    %v70 = vld [vmem:[%s2] sm:$0x1]
    %v72 = vlaneseq
    %v73 = vshrl.u32 %v72, 7
    %v74 = vsub.s32 0, %v73
    %v75 = vrot.slane %v70, %v74
    %v93 = vunpack.c.l.b16 %v54
    %v94 = vunpack.c.l.b16 %v55
    %v95 = vunpack.c.l.b16 %v56
    %v96 = vunpack.c.l.b16 %v57
    %v97 = vunpack.c.l.b16 %v58
    %v98 = vunpack.c.l.b16 %v59
    %v99 = vunpack.c.l.b16 %v60
    %v100 = vunpack.c.l.b16 %v61
    %v101 = vunpack.c.l.b16 %v62
    %v102 = vunpack.c.l.b16 %v63
    %v103 = vunpack.c.l.b16 %v64
    %v104 = vunpack.c.l.b16 %v65
    %v105 = vunpack.c.l.b16 %v66
    %v106 = vunpack.c.l.b16 %v67
    %v107 = vunpack.c.l.b16 %v68
    %v108 = vunpack.c.l.b16 %v69
    %v109 = vpack.c.b16 %v94, %v93
    %v110 = vpack.c.b16 %v96, %v95
    %v111 = vpack.c.b16 %v98, %v97
    %v112 = vpack.c.b16 %v100, %v99
    %v113 = vpack.c.b16 %v102, %v101
    %v114 = vpack.c.b16 %v104, %v103
    %v115 = vpack.c.b16 %v106, %v105
    %v116 = vpack.c.b16 %v108, %v107
    %125 = vmatprep.subr.bf16.mxu0 0
    %126 = vmatpush1.bf16.msra.mxu0 %v116
    %127 = vmatprep.subr.bf16.mxu0 0
    %128 = vmatpush1.bf16.msra.mxu0 %v115
    %129 = vmatprep.subr.bf16.mxu0 0
    %130 = vmatpush1.bf16.msra.mxu0 %v114
    %131 = vmatprep.subr.bf16.mxu0 0
    %132 = vmatpush1.bf16.msra.mxu0 %v113
    %133 = vmatprep.subr.bf16.mxu0 0
    %134 = vmatpush1.bf16.msra.mxu0 %v112
    %135 = vmatprep.subr.bf16.mxu0 0
    %136 = vmatpush1.bf16.msra.mxu0 %v111
    %137 = vmatprep.subr.bf16.mxu0 0
    %138 = vmatpush1.bf16.msra.mxu0 %v110
    %139 = vmatprep.subr.bf16.mxu0 0
    %140 = vmatpush1.bf16.msra.mxu0 %v109
    %141 = vmatprep.subr.bf16.mxu0 0
    %142 = vmatpush2.bf16.msra.mxu0 0
    %143 = vmatprep.subr.bf16.mxu0 0
    %144 = vmatpush2.bf16.msra.mxu0 0
    %145 = vmatprep.subr.bf16.mxu0 0
    %146 = vmatpush2.bf16.msra.mxu0 0
    %147 = vmatprep.subr.bf16.mxu0 0
    %148 = vmatpush2.bf16.msra.mxu0 0
    %149 = vmatprep.subr.bf16.mxu0 0
    %150 = vmatpush2.bf16.msra.mxu0 0
    %151 = vmatprep.subr.bf16.mxu0 0
    %152 = vmatpush2.bf16.msra.mxu0 0
    %153 = vmatprep.subr.bf16.mxu0 0
    %154 = vmatpush2.bf16.msra.mxu0 0
    %155 = vmatprep.subr.bf16.mxu0 0
    %156 = vmatpush2.bf16.msra.mxu0 0
    %157 = vmatprep.mubr.bf16.mxu0 0
    %158 = vmatmul.mubr.bf16.gmra.mxu0 %v53
    %v159 = vpop.f32.mrf.mxu0
    %v160 = vadd.f32 %v75, %v159
    %v161 = vpop.f32.mrf.mxu0
    %v162 = vpop.f32.mrf.mxu0
    %v163 = vadd.f32 %v75, %v162
    %v164 = vpop.f32.mrf.mxu0
    %165 = vdwg.mxu0
    %vm166 = vcmp.gt.f32.partialorder %v160, 0.0
    %vm167 = vcmp.gt.f32.partialorder %v163, 0.0
    %v168 = vmul.f32 %v160, 0.1
    %v169 = vmul.f32 %v163, 0.1
    %v170 = vsel %vm166, %v160, %v168
    %v171 = vsel %vm167, %v163, %v169
    %v172 = vpack.c.bf16 %v171, %v170
    %v174 = vunpack.c.l.b16 %v172
    %v175 = vunpack.c.h.b16 %v172
    %v176 = vpack.c.b16 %v174, %v174
    %v177 = vpack.c.b16 %v175, %v175
    %180 = vst [vmem:[%s6] sm:$0xf] %v176
    %181 = vst [vmem:[%s6 + $0x4] sm:$0xf] %v177
    %v182 = vld [vmem:[#allocation4] sm:$0xf]
    %v183 = vld [vmem:[#allocation4 + $0x4] sm:$0xf]
    %v184 = vld [vmem:[#allocation4 + $0x8] sm:$0xf]
    %v185 = vld [vmem:[#allocation4 + $0xc] sm:$0xf]
    %v186 = vld [vmem:[#allocation4 + $0x10] sm:$0xf]
    %v187 = vld [vmem:[#allocation4 + $0x14] sm:$0xf]
    %v188 = vld [vmem:[#allocation4 + $0x18] sm:$0xf]
    %v189 = vld [vmem:[#allocation4 + $0x1c] sm:$0xf]
    %v190 = vld [vmem:[#allocation4 + $0x20] sm:$0xf]
    %v191 = vld [vmem:[#allocation4 + $0x24] sm:$0xf]
    %v192 = vld [vmem:[#allocation4 + $0x28] sm:$0xf]
    %v193 = vld [vmem:[#allocation4 + $0x2c] sm:$0xf]
    %v194 = vld [vmem:[#allocation4 + $0x30] sm:$0xf]
    %v195 = vld [vmem:[#allocation4 + $0x34] sm:$0xf]
    %v196 = vld [vmem:[#allocation4 + $0x38] sm:$0xf]
    %v197 = vld [vmem:[#allocation4 + $0x3c] sm:$0xf]
    %v198 = vld [vmem:[%s4] sm:$0x1]
    %v200 = vlaneseq
    %v201 = vshrl.u32 %v200, 7
    %v202 = vsub.s32 0, %v201
    %v203 = vrot.slane %v198, %v202
    %v221 = vunpack.c.l.b16 %v182
    %v222 = vunpack.c.l.b16 %v183
    %v223 = vunpack.c.l.b16 %v184
    %v224 = vunpack.c.l.b16 %v185
    %v225 = vunpack.c.l.b16 %v186
    %v226 = vunpack.c.l.b16 %v187
    %v227 = vunpack.c.l.b16 %v188
    %v228 = vunpack.c.l.b16 %v189
    %v229 = vunpack.c.l.b16 %v190
    %v230 = vunpack.c.l.b16 %v191
    %v231 = vunpack.c.l.b16 %v192
    %v232 = vunpack.c.l.b16 %v193
    %v233 = vunpack.c.l.b16 %v194
    %v234 = vunpack.c.l.b16 %v195
    %v235 = vunpack.c.l.b16 %v196
    %v236 = vunpack.c.l.b16 %v197
    %v237 = vpack.c.b16 %v222, %v221
    %v238 = vpack.c.b16 %v224, %v223
    %v239 = vpack.c.b16 %v226, %v225
    %v240 = vpack.c.b16 %v228, %v227
    %v241 = vpack.c.b16 %v230, %v229
    %v242 = vpack.c.b16 %v232, %v231
    %v243 = vpack.c.b16 %v234, %v233
    %v244 = vpack.c.b16 %v236, %v235
    %253 = vmatprep.subr.bf16.mxu0 0
    %254 = vmatpush1.bf16.msra.mxu0 %v244
    %255 = vmatprep.subr.bf16.mxu0 0
    %256 = vmatpush1.bf16.msra.mxu0 %v243
    %257 = vmatprep.subr.bf16.mxu0 0
    %258 = vmatpush1.bf16.msra.mxu0 %v242
    %259 = vmatprep.subr.bf16.mxu0 0
    %260 = vmatpush1.bf16.msra.mxu0 %v241
    %261 = vmatprep.subr.bf16.mxu0 0
    %262 = vmatpush1.bf16.msra.mxu0 %v240
    %263 = vmatprep.subr.bf16.mxu0 0
    %264 = vmatpush1.bf16.msra.mxu0 %v239
    %265 = vmatprep.subr.bf16.mxu0 0
    %266 = vmatpush1.bf16.msra.mxu0 %v238
    %267 = vmatprep.subr.bf16.mxu0 0
    %268 = vmatpush1.bf16.msra.mxu0 %v237
    %269 = vmatprep.subr.bf16.mxu0 0
    %270 = vmatpush2.bf16.msra.mxu0 0
    %271 = vmatprep.subr.bf16.mxu0 0
    %272 = vmatpush2.bf16.msra.mxu0 0
    %273 = vmatprep.subr.bf16.mxu0 0
    %274 = vmatpush2.bf16.msra.mxu0 0
    %275 = vmatprep.subr.bf16.mxu0 0
    %276 = vmatpush2.bf16.msra.mxu0 0
    %277 = vmatprep.subr.bf16.mxu0 0
    %278 = vmatpush2.bf16.msra.mxu0 0
    %279 = vmatprep.subr.bf16.mxu0 0
    %280 = vmatpush2.bf16.msra.mxu0 0
    %281 = vmatprep.subr.bf16.mxu0 0
    %282 = vmatpush2.bf16.msra.mxu0 0
    %283 = vmatprep.subr.bf16.mxu0 0
    %284 = vmatpush2.bf16.msra.mxu0 0
    %285 = vmatprep.mubr.bf16.mxu0 0
    %286 = vmatmul.mubr.bf16.gmra.mxu0 %v172
    %v287 = vpop.f32.mrf.mxu0
    %v288 = vadd.f32 %v203, %v287
    %v289 = vpop.f32.mrf.mxu0
    %v290 = vpop.f32.mrf.mxu0
    %v291 = vadd.f32 %v203, %v290
    %v292 = vpop.f32.mrf.mxu0
    %293 = vdwg.mxu0
    %294 = vst [vmem:[%s5] sm:$0xff] %v288
    %295 = vst [vmem:[%s5 + $0x8] sm:$0xff] %v291
    // Predicated region
    $region30: #{_forward_impl.1} parent=1 // pred_check
      _
    $region31: #{_forward_impl.1} parent=1 // pred_check_branch
      %297 = sbr.rel (0) target = $region33
    $region32: #{_forward_impl.1} parent=1 // pred_region
      _
    $region33: #{_forward_impl.1} parent=1 // pred_fallthru
      _
    // Predicated region
    $region34: #{_forward_impl.1} parent=1 // pred_check
      _
    $region35: #{_forward_impl.1} parent=1 // pred_check_branch
      %299 = sbr.rel (0) target = $region37
    $region36: #{_forward_impl.1} parent=1 // pred_region
      _
    $region37: #{_forward_impl.1} parent=1 // pred_fallthru
      _
    // Predicated region
    $region38: #{_forward_impl.1} parent=1 // pred_check
      _
    $region39: #{_forward_impl.1} parent=1 // pred_check_branch
      %301 = sbr.rel (0) target = $region41
    $region40: #{_forward_impl.1} parent=1 // pred_region
      _
    $region41: #{_forward_impl.1} parent=1 // pred_fallthru
      _
    // Predicated region
    $region42: #{_forward_impl.1} parent=1 // pred_check
      _
    $region43: #{_forward_impl.1} parent=1 // pred_check_branch
      %303 = sbr.rel (0) target = $region45
    $region44: #{_forward_impl.1} parent=1 // pred_region
      _
    $region45: #{_forward_impl.1} parent=1 // pred_fallthru
      _
    %304 = vsyncpa [#allocation3], 1
    %305 = vsyncpa [#allocation5], 1

// kernel: _forward_impl.1
$region0: #{_forward_impl.1}
  #allocation0 [shape = 'u32[]', space=smem, size = 0x4, offset = 0x4, fixed_abs, tag = 'smem constant byte address 0x4 - core index']
  #allocation1 [shape = 'u32[144,128]{1,0:T(1,128)}', space=vmem, size = 0x12000, scoped, tag = 'internal scratch']
  %s0 = inlined_call_operand.vmem [shape: f32[16,128], index: 0, kind: input, shape index: {}]
  %s1 = inlined_call_operand.hbm [shape: bf16[128,128], index: 1, kind: input, shape index: {}]
  %s2 = inlined_call_operand.vmem [shape: f32[1,128], index: 2, kind: input, shape index: {}]
  %s3 = inlined_call_operand.hbm [shape: bf16[128,128], index: 3, kind: input, shape index: {}]
  %s4 = inlined_call_operand.vmem [shape: f32[1,128], index: 4, kind: input, shape index: {}]
  %s5 = inlined_call_operand.vmem [shape: f32[16,128], index: 5, kind: output, shape index: {0}]
  %s6 = inlined_call_operand.vmem [shape: bf16[16,128], index: 6, kind: output, shape index: {1}]
  %7 = xla_tuple %s5, %s6
  %s8 = sld [smem:[#allocation0]]
  $region46: #{_forward_impl.1} parent=0
    _
  %s10 = ssub.s32 1, %s8
  %s11 = scalar_select 0, %s10, %s8
  $region1: #{_forward_impl.1} parent=0
    #allocation2 [shape = 'u8[32768]{0}', space=vmem, size = 0x8000, scoped, tag = 'input window, operand 1, single buffered']
    #allocation3 [shape = 's32[1]{0}', space=sflag, size = 0x4, scoped, tag = 'scoped memory for _forward_impl.1']
    #allocation4 [shape = 'u8[32768]{0}', space=vmem, size = 0x8000, scoped, tag = 'input window, operand 3, single buffered']
    #allocation5 [shape = 's32[1]{0}', space=sflag, size = 0x4, scoped, tag = 'scoped memory for _forward_impl.1']
    %12 = vsyncpa [#allocation3], 0
    %13 = vsyncpa [#allocation5], 0
    // Predicated region
    $region2: #{_forward_impl.1} parent=1 // pred_check
      _
    $region3: #{_forward_impl.1} parent=1 // pred_check_branch
      %15 = sbr.rel (0) target = $region5
    $region4: #{_forward_impl.1} parent=1 // pred_region
      _
    $region5: #{_forward_impl.1} parent=1 // pred_fallthru
      _
    // Predicated region
    $region6: #{_forward_impl.1} parent=1 // pred_check
      _
    $region7: #{_forward_impl.1} parent=1 // pred_check_branch
      %17 = sbr.rel (0) target = $region9
    $region8: #{_forward_impl.1} parent=1 // pred_region
      %s19 = ssub.s32 1024, 1024
      %20 = vsyncadd [#allocation3], %s19
      %s21 = sshll.u32 [#allocation2], 4
      %s22 = int_to_ptr.vmem [resolvable:$true] %s21
      %27 = dma.hbm_to_vmem [thread:$0]  %s1, 1024, %s22, [#allocation3], 64, 64, 4
    $region9: #{_forward_impl.1} parent=1 // pred_fallthru
      _
    // Predicated region
    $region10: #{_forward_impl.1} parent=1 // pred_check
      _
    $region11: #{_forward_impl.1} parent=1 // pred_check_branch
      %29 = sbr.rel (0) target = $region13
    $region12: #{_forward_impl.1} parent=1 // pred_region
      _
    $region13: #{_forward_impl.1} parent=1 // pred_fallthru
      _
    // Predicated region
    $region14: #{_forward_impl.1} parent=1 // pred_check
      _
    $region15: #{_forward_impl.1} parent=1 // pred_check_branch
      %31 = sbr.rel (0) target = $region17
    $region16: #{_forward_impl.1} parent=1 // pred_region
      %s33 = ssub.s32 1024, 1024
      %34 = vsyncadd [#allocation5], %s33
      %s35 = sshll.u32 [#allocation4], 4
      %s36 = int_to_ptr.vmem [resolvable:$true] %s35
      %41 = dma.hbm_to_vmem [thread:$0]  %s3, 1024, %s36, [#allocation5], 64, 64, 4
    $region17: #{_forward_impl.1} parent=1 // pred_fallthru
      _
    // Predicated region
    $region18: #{_forward_impl.1} parent=1 // pred_check
      _
    $region19: #{_forward_impl.1} parent=1 // pred_check_branch
      %43 = sbr.rel (0) target = $region21
    $region20: #{_forward_impl.1} parent=1 // pred_region
      _
    $region21: #{_forward_impl.1} parent=1 // pred_fallthru
      _
    // Predicated region
    $region22: #{_forward_impl.1} parent=1 // pred_check
      _
    $region23: #{_forward_impl.1} parent=1 // pred_check_branch
      %45 = sbr.rel (0) target = $region25
    $region24: #{_forward_impl.1} parent=1 // pred_region
      %46 = dma.done [#allocation3], 1024
    $region25: #{_forward_impl.1} parent=1 // pred_fallthru
      _
    // Predicated region
    $region26: #{_forward_impl.1} parent=1 // pred_check
      _
    $region27: #{_forward_impl.1} parent=1 // pred_check_branch
      %48 = sbr.rel (0) target = $region29
    $region28: #{_forward_impl.1} parent=1 // pred_region
      %49 = dma.done [#allocation5], 1024
    $region29: #{_forward_impl.1} parent=1 // pred_fallthru
      _
    %v51 = vld [vmem:[%s0] sm:$0xff]
    %v52 = vld [vmem:[%s0 + $0x8] sm:$0xff]
    %v53 = vpack.c.bf16 %v52, %v51
    %v54 = vld [vmem:[#allocation2] sm:$0xf]
    %v55 = vld [vmem:[#allocation2 + $0x4] sm:$0xf]
    %v56 = vld [vmem:[#allocation2 + $0x8] sm:$0xf]
    %v57 = vld [vmem:[#allocation2 + $0xc] sm:$0xf]
    %v58 = vld [vmem:[#allocation2 + $0x10] sm:$0xf]
    %v59 = vld [vmem:[#allocation2 + $0x14] sm:$0xf]
    %v60 = vld [vmem:[#allocation2 + $0x18] sm:$0xf]
    %v61 = vld [vmem:[#allocation2 + $0x1c] sm:$0xf]
    %v62 = vld [vmem:[#allocation2 + $0x20] sm:$0xf]
    %v63 = vld [vmem:[#allocation2 + $0x24] sm:$0xf]
    %v64 = vld [vmem:[#allocation2 + $0x28] sm:$0xf]
    %v65 = vld [vmem:[#allocation2 + $0x2c] sm:$0xf]
    %v66 = vld [vmem:[#allocation2 + $0x30] sm:$0xf]
    %v67 = vld [vmem:[#allocation2 + $0x34] sm:$0xf]
    %v68 = vld [vmem:[#allocation2 + $0x38] sm:$0xf]
    %v69 = vld [vmem:[#allocation2 + $0x3c] sm:$0xf]
    %v70 = vld [vmem:[%s2] sm:$0x1]
    %v72 = vlaneseq
    %v73 = vshrl.u32 %v72, 7
    %v74 = vsub.s32 0, %v73
    %v75 = vrot.slane %v70, %v74
    %v93 = vunpack.c.l.b16 %v54
    %v94 = vunpack.c.l.b16 %v55
    %v95 = vunpack.c.l.b16 %v56
    %v96 = vunpack.c.l.b16 %v57
    %v97 = vunpack.c.l.b16 %v58
    %v98 = vunpack.c.l.b16 %v59
    %v99 = vunpack.c.l.b16 %v60
    %v100 = vunpack.c.l.b16 %v61
    %v101 = vunpack.c.l.b16 %v62
    %v102 = vunpack.c.l.b16 %v63
    %v103 = vunpack.c.l.b16 %v64
    %v104 = vunpack.c.l.b16 %v65
    %v105 = vunpack.c.l.b16 %v66
    %v106 = vunpack.c.l.b16 %v67
    %v107 = vunpack.c.l.b16 %v68
    %v108 = vunpack.c.l.b16 %v69
    %v109 = vpack.c.b16 %v94, %v93
    %v110 = vpack.c.b16 %v96, %v95
    %v111 = vpack.c.b16 %v98, %v97
    %v112 = vpack.c.b16 %v100, %v99
    %v113 = vpack.c.b16 %v102, %v101
    %v114 = vpack.c.b16 %v104, %v103
    %v115 = vpack.c.b16 %v106, %v105
    %v116 = vpack.c.b16 %v108, %v107
    %125 = vmatprep.subr.bf16.mxu0 0
    %126 = vmatpush1.bf16.msra.mxu0 %v116
    %127 = vmatprep.subr.bf16.mxu0 0
    %128 = vmatpush1.bf16.msra.mxu0 %v115
    %129 = vmatprep.subr.bf16.mxu0 0
    %130 = vmatpush1.bf16.msra.mxu0 %v114
    %131 = vmatprep.subr.bf16.mxu0 0
    %132 = vmatpush1.bf16.msra.mxu0 %v113
    %133 = vmatprep.subr.bf16.mxu0 0
    %134 = vmatpush1.bf16.msra.mxu0 %v112
    %135 = vmatprep.subr.bf16.mxu0 0
    %136 = vmatpush1.bf16.msra.mxu0 %v111
    %137 = vmatprep.subr.bf16.mxu0 0
    %138 = vmatpush1.bf16.msra.mxu0 %v110
    %139 = vmatprep.subr.bf16.mxu0 0
    %140 = vmatpush1.bf16.msra.mxu0 %v109
    %141 = vmatprep.subr.bf16.mxu0 0
    %142 = vmatpush2.bf16.msra.mxu0 0
    %143 = vmatprep.subr.bf16.mxu0 0
    %144 = vmatpush2.bf16.msra.mxu0 0
    %145 = vmatprep.subr.bf16.mxu0 0
    %146 = vmatpush2.bf16.msra.mxu0 0
    %147 = vmatprep.subr.bf16.mxu0 0
    %148 = vmatpush2.bf16.msra.mxu0 0
    %149 = vmatprep.subr.bf16.mxu0 0
    %150 = vmatpush2.bf16.msra.mxu0 0
    %151 = vmatprep.subr.bf16.mxu0 0
    %152 = vmatpush2.bf16.msra.mxu0 0
    %153 = vmatprep.subr.bf16.mxu0 0
    %154 = vmatpush2.bf16.msra.mxu0 0
    %155 = vmatprep.subr.bf16.mxu0 0
    %156 = vmatpush2.bf16.msra.mxu0 0
    %157 = vmatprep.mubr.bf16.mxu0 0
    %158 = vmatmul.mubr.bf16.gmra.mxu0 %v53
    %v159 = vpop.f32.mrf.mxu0
    %v160 = vadd.f32 %v75, %v159
    %v161 = vpop.f32.mrf.mxu0
    %v162 = vpop.f32.mrf.mxu0
    %v163 = vadd.f32 %v75, %v162
    %v164 = vpop.f32.mrf.mxu0
    %165 = vdwg.mxu0
    %vm166 = vcmp.gt.f32.partialorder %v160, 0.0
    %vm167 = vcmp.gt.f32.partialorder %v163, 0.0
    %v168 = vmul.f32 %v160, 0.1
    %v169 = vmul.f32 %v163, 0.1
    %v170 = vsel %vm166, %v160, %v168
    %v171 = vsel %vm167, %v163, %v169
    %v172 = vpack.c.bf16 %v171, %v170
    %v174 = vunpack.c.l.b16 %v172
    %v175 = vunpack.c.h.b16 %v172
    %v176 = vpack.c.b16 %v174, %v174
    %v177 = vpack.c.b16 %v175, %v175
    %180 = vst [vmem:[%s6] sm:$0xf] %v176
    %181 = vst [vmem:[%s6 + $0x4] sm:$0xf] %v177
    %v182 = vld [vmem:[#allocation4] sm:$0xf]
    %v183 = vld [vmem:[#allocation4 + $0x4] sm:$0xf]
    %v184 = vld [vmem:[#allocation4 + $0x8] sm:$0xf]
    %v185 = vld [vmem:[#allocation4 + $0xc] sm:$0xf]
    %v186 = vld [vmem:[#allocation4 + $0x10] sm:$0xf]
    %v187 = vld [vmem:[#allocation4 + $0x14] sm:$0xf]
    %v188 = vld [vmem:[#allocation4 + $0x18] sm:$0xf]
    %v189 = vld [vmem:[#allocation4 + $0x1c] sm:$0xf]
    %v190 = vld [vmem:[#allocation4 + $0x20] sm:$0xf]
    %v191 = vld [vmem:[#allocation4 + $0x24] sm:$0xf]
    %v192 = vld [vmem:[#allocation4 + $0x28] sm:$0xf]
    %v193 = vld [vmem:[#allocation4 + $0x2c] sm:$0xf]
    %v194 = vld [vmem:[#allocation4 + $0x30] sm:$0xf]
    %v195 = vld [vmem:[#allocation4 + $0x34] sm:$0xf]
    %v196 = vld [vmem:[#allocation4 + $0x38] sm:$0xf]
    %v197 = vld [vmem:[#allocation4 + $0x3c] sm:$0xf]
    %v198 = vld [vmem:[%s4] sm:$0x1]
    %v200 = vlaneseq
    %v201 = vshrl.u32 %v200, 7
    %v202 = vsub.s32 0, %v201
    %v203 = vrot.slane %v198, %v202
    %v221 = vunpack.c.l.b16 %v182
    %v222 = vunpack.c.l.b16 %v183
    %v223 = vunpack.c.l.b16 %v184
    %v224 = vunpack.c.l.b16 %v185
    %v225 = vunpack.c.l.b16 %v186
    %v226 = vunpack.c.l.b16 %v187
    %v227 = vunpack.c.l.b16 %v188
    %v228 = vunpack.c.l.b16 %v189
    %v229 = vunpack.c.l.b16 %v190
    %v230 = vunpack.c.l.b16 %v191
    %v231 = vunpack.c.l.b16 %v192
    %v232 = vunpack.c.l.b16 %v193
    %v233 = vunpack.c.l.b16 %v194
    %v234 = vunpack.c.l.b16 %v195
    %v235 = vunpack.c.l.b16 %v196
    %v236 = vunpack.c.l.b16 %v197
    %v237 = vpack.c.b16 %v222, %v221
    %v238 = vpack.c.b16 %v224, %v223
    %v239 = vpack.c.b16 %v226, %v225
    %v240 = vpack.c.b16 %v228, %v227
    %v241 = vpack.c.b16 %v230, %v229
    %v242 = vpack.c.b16 %v232, %v231
    %v243 = vpack.c.b16 %v234, %v233
    %v244 = vpack.c.b16 %v236, %v235
    %253 = vmatprep.subr.bf16.mxu0 0
    %254 = vmatpush1.bf16.msra.mxu0 %v244
    %255 = vmatprep.subr.bf16.mxu0 0
    %256 = vmatpush1.bf16.msra.mxu0 %v243
    %257 = vmatprep.subr.bf16.mxu0 0
    %258 = vmatpush1.bf16.msra.mxu0 %v242
    %259 = vmatprep.subr.bf16.mxu0 0
    %260 = vmatpush1.bf16.msra.mxu0 %v241
    %261 = vmatprep.subr.bf16.mxu0 0
    %262 = vmatpush1.bf16.msra.mxu0 %v240
    %263 = vmatprep.subr.bf16.mxu0 0
    %264 = vmatpush1.bf16.msra.mxu0 %v239
    %265 = vmatprep.subr.bf16.mxu0 0
    %266 = vmatpush1.bf16.msra.mxu0 %v238
    %267 = vmatprep.subr.bf16.mxu0 0
    %268 = vmatpush1.bf16.msra.mxu0 %v237
    %269 = vmatprep.subr.bf16.mxu0 0
    %270 = vmatpush2.bf16.msra.mxu0 0
    %271 = vmatprep.subr.bf16.mxu0 0
    %272 = vmatpush2.bf16.msra.mxu0 0
    %273 = vmatprep.subr.bf16.mxu0 0
    %274 = vmatpush2.bf16.msra.mxu0 0
    %275 = vmatprep.subr.bf16.mxu0 0
    %276 = vmatpush2.bf16.msra.mxu0 0
    %277 = vmatprep.subr.bf16.mxu0 0
    %278 = vmatpush2.bf16.msra.mxu0 0
    %279 = vmatprep.subr.bf16.mxu0 0
    %280 = vmatpush2.bf16.msra.mxu0 0
    %281 = vmatprep.subr.bf16.mxu0 0
    %282 = vmatpush2.bf16.msra.mxu0 0
    %283 = vmatprep.subr.bf16.mxu0 0
    %284 = vmatpush2.bf16.msra.mxu0 0
    %285 = vmatprep.mubr.bf16.mxu0 0
    %286 = vmatmul.mubr.bf16.gmra.mxu0 %v172
    %v287 = vpop.f32.mrf.mxu0
    %v288 = vadd.f32 %v203, %v287
    %v289 = vpop.f32.mrf.mxu0
    %v290 = vpop.f32.mrf.mxu0
    %v291 = vadd.f32 %v203, %v290
    %v292 = vpop.f32.mrf.mxu0
    %293 = vdwg.mxu0
    %294 = vst [vmem:[%s5] sm:$0xff] %v288
    %295 = vst [vmem:[%s5 + $0x8] sm:$0xff] %v291
    // Predicated region
    $region30: #{_forward_impl.1} parent=1 // pred_check
      _
    $region31: #{_forward_impl.1} parent=1 // pred_check_branch
      %297 = sbr.rel (0) target = $region33
    $region32: #{_forward_impl.1} parent=1 // pred_region
      _
    $region33: #{_forward_impl.1} parent=1 // pred_fallthru
      _
    // Predicated region
    $region34: #{_forward_impl.1} parent=1 // pred_check
      _
    $region35: #{_forward_impl.1} parent=1 // pred_check_branch
      %299 = sbr.rel (0) target = $region37
    $region36: #{_forward_impl.1} parent=1 // pred_region
      _
    $region37: #{_forward_impl.1} parent=1 // pred_fallthru
      _
    // Predicated region
    $region38: #{_forward_impl.1} parent=1 // pred_check
      _
    $region39: #{_forward_impl.1} parent=1 // pred_check_branch
      %301 = sbr.rel (0) target = $region41
    $region40: #{_forward_impl.1} parent=1 // pred_region
      _
    $region41: #{_forward_impl.1} parent=1 // pred_fallthru
      _
    // Predicated region
    $region42: #{_forward_impl.1} parent=1 // pred_check
      _
    $region43: #{_forward_impl.1} parent=1 // pred_check_branch
      %303 = sbr.rel (0) target = $region45
    $region44: #{_forward_impl.1} parent=1 // pred_region
      _
    $region45: #{_forward_impl.1} parent=1 // pred_fallthru
      _
    %304 = vsyncpa [#allocation3], 1
    %305 = vsyncpa [#allocation5], 1

</llo_original>
